<compile_context>
chip_gen: v6e
topology: v6e:2x2x1
jax: 0.10.0
libtpu: 0.0.40
codegen_flags: <defaults>
</compile_context>

<pallas_src>
import jax
import jax.numpy as jnp
from jax.experimental import pallas as pl
from jax.experimental.pallas import tpu as pltpu


def _isht_kernel(a_ref, b_ref, o_ref):
    # One MXU call per output tile; full-K contraction, f32 accumulation.
    o_ref[...] = jnp.dot(
        a_ref[...], b_ref[...], preferred_element_type=jnp.float32
    ).astype(o_ref.dtype)


def _round_up(x, m):
    return ((x + m - 1) // m) * m


def _choose_tn(M, K, V_pad128, *, budget_bytes=24 << 20, max_tn=2048):
    """Largest lane-dense tile width fitting a conservative VMEM budget."""
    itemsize = 4  # be conservative (f32)
    best = 128
    for tn in range(128, max_tn + 1, 128):
        # A block (double-buffered by the pipeline) + B tile x2 + out tile x2.
        vmem = itemsize * (2 * M * K + 2 * K * tn + 2 * M * tn)
        if vmem <= budget_bytes:
            best = tn
    # Never pad V beyond one extra 128-lane tile's worth.
    best = min(best, V_pad128)
    # Keep >= 2 grid steps along V when possible so both v7x TCs get work.
    if V_pad128 >= 256:
        best = min(best, max(128, (V_pad128 // 2) // 128 * 128))
    return best


@jax.jit
def isht(x, Y):
    """Inverse spherical harmonic transform.

    x: [batch, n_ch, K]
    Y: [(L+1)**2, n_vertex]
    returns: [batch, n_ch, n_vertex]
    """
    batch, n_ch, K = x.shape
    # Matches torch: self.Y[0:x.shape[-1], :]
    B = Y[0:K, :]
    V = B.shape[-1]

    M = batch * n_ch
    A = x.reshape(M, K)

    # Tile choice + padding (handles arbitrary n_vertex, no even-tiling assert).
    V_pad128 = _round_up(V, 128)
    tn = _choose_tn(M, K, V_pad128)
    V_pad = _round_up(V, tn)
    if V_pad != V:
        B = jnp.pad(B, ((0, 0), (0, V_pad - V)))

    grid = (V_pad // tn,)

    itemsize = jnp.dtype(x.dtype).itemsize
    cost = pl.CostEstimate(
        flops=2 * M * K * V_pad,
        transcendentals=0,
        bytes_accessed=itemsize * (M * K + K * V_pad + M * V_pad),
    )

    out = pl.pallas_call(
        _isht_kernel,
        out_shape=jax.ShapeDtypeStruct((M, V_pad), x.dtype),
        grid_spec=pltpu.PrefetchScalarGridSpec(
            num_scalar_prefetch=0,
            grid=grid,
            in_specs=[
                # A: whole [M, K] block, resident across the V grid axis
                # (same block index every step -> fetched from HBM once).
                pl.BlockSpec((M, K), lambda j: (0, 0)),
                # B: lane-dense [K, tn] column slab of the harmonic basis.
                pl.BlockSpec((K, tn), lambda j: (0, j)),
            ],
            out_specs=pl.BlockSpec((M, tn), lambda j: (0, j)),
        ),
        compiler_params=pltpu.CompilerParams(
            dimension_semantics=("parallel",),
            # Raise v5e's 16 MiB default; stays well under v7x's 64 MiB physical.
            vmem_limit_bytes=40 << 20,
        ),
        cost_estimate=cost,
    )(A, B)

    return out[:, :V].reshape(batch, n_ch, V)


if __name__ == "__main__":
    # Small, consistent shapes:
    #   L = 3  -> K = (L+1)**2 = 16 spectral coefficients
    #   n_vertex = 642 (icosahedral level-3 mesh; NOT a multiple of 128)
    #   batch = 2, n_ch = 4
    L = 3
    K = (L + 1) ** 2          # 16
    batch, n_ch = 2, 4

    key = jax.random.PRNGKey(0)
    kx, ky = jax.random.split(key)

    for n_vertex in (642, 256):   # ragged and lane-aligned vertex counts
        x = jax.random.normal(kx, (batch, n_ch, K), dtype=jnp.float32)
        Y = jax.random.normal(ky, (K, n_vertex), dtype=jnp.float32)

        out = isht(x, Y)
        out = jax.block_until_ready(out)

        ref = jnp.matmul(x, Y[0:K, :])
        assert out.shape == (batch, n_ch, n_vertex)
        assert jnp.allclose(out, ref, atol=1e-3, rtol=1e-3)

    print("KERNEL_OK")
</pallas_src>

<mosaic_0001>
module attributes {stable_mosaic.version = 11 : i64} {
  func.func @_isht_kernel(%arg0: i32, %arg1: memref<8x16xf32, #tpu.memory_space<vmem>>, %arg2: memref<16x384xf32, #tpu.memory_space<vmem>>, %arg3: memref<8x384xf32, #tpu.memory_space<vmem>>) attributes {dimension_semantics = [#tpu.dimension_semantics<parallel>], iteration_bounds = array<i64: 2>, scalar_prefetch = 0 : i64, scratch_operands = 0 : i64, tpu.core_type = #tpu.core_type<tc>, window_params = [{pipeline_mode = #tpu.pipeline_mode<synchronous>, transform_indices = @transform_0, window_bounds = array<i64: 8, 16>}, {transform_indices = @transform_1, window_bounds = array<i64: 16, 384>}, {transform_indices = @transform_2, window_bounds = array<i64: 8, 384>}]} {
    %c0 = arith.constant 0 : index
    %c0_0 = arith.constant 0 : index
    %0 = vector.load %arg1[%c0, %c0_0] : memref<8x16xf32, #tpu.memory_space<vmem>>, vector<8x16xf32>
    %c0_1 = arith.constant 0 : index
    %c0_2 = arith.constant 0 : index
    %1 = vector.load %arg2[%c0_1, %c0_2] : memref<16x384xf32, #tpu.memory_space<vmem>>, vector<16x384xf32>
    %cst = arith.constant dense<0.000000e+00> : vector<8x384xf32>
    %2 = tpu.matmul %0, %1, %cst {dimension_numbers = #tpu.dot_dimension_numbers<[1], [0], [0], [1], [0, 0, 1, 1], [], []>} : vector<8x16xf32>, vector<16x384xf32>, vector<8x384xf32> -> vector<8x384xf32>
    %c0_3 = arith.constant 0 : index
    %c0_4 = arith.constant 0 : index
    %3 = vector.load %arg3[%c0_3, %c0_4] : memref<8x384xf32, #tpu.memory_space<vmem>>, vector<8x384xf32>
    tpu.vector_store %arg3[%c0_3, %c0_4], %2 {strides = array<i32>} : memref<8x384xf32, #tpu.memory_space<vmem>>, vector<8x384xf32>,
    return
  }
  func.func @transform_0(%arg0: i32) -> (i32, i32) {
    %c0_i32 = arith.constant 0 : i32
    %c0_i32_0 = arith.constant 0 : i32
    %c0_i32_1 = arith.constant 0 : i32
    return %c0_i32, %c0_i32_0 : i32, i32
  }
  func.func @transform_1(%arg0: i32) -> (i32, i32) {
    %c0_i32 = arith.constant 0 : i32
    %c0_i32_0 = arith.constant 0 : i32
    return %c0_i32, %arg0 : i32, i32
  }
  func.func @transform_2(%arg0: i32) -> (i32, i32) {
    %c0_i32 = arith.constant 0 : i32
    %c0_i32_0 = arith.constant 0 : i32
    return %c0_i32, %arg0 : i32, i32
  }
}

</mosaic_0001>

<llo_original>
// kernel: isht.1
$region0: #{isht.1}
  #allocation0 [shape = 'u32[]', space=smem, size = 0x4, offset = 0x4, fixed_abs, tag = 'smem constant byte address 0x4 - core index']
  #allocation1 [shape = 'u32[144,128]{1,0:T(1,128)}', space=vmem, size = 0x12000, scoped, tag = 'internal scratch']
  %s0 = inlined_call_operand.vmem [shape: f32[8,16], index: 0, kind: input, shape index: {}]
  %s1 = inlined_call_operand.vmem [shape: f32[16,768], index: 1, kind: input, shape index: {}]
  %s2 = inlined_call_operand.vmem [shape: f32[8,768], index: 2, kind: output, shape index: {}]
  %s3 = sld [smem:[#allocation0]]
  $region64: #{isht.1} parent=0
    _
  %s5 = ssub.s32 1, %s3
  %s6 = scalar_select 0, %s5, %s3
  $region1: #{isht.1} parent=0
    #allocation2 [shape = 'u8[49152]{0}', space=vmem, size = 0xc000, scoped, tag = 'input window, operand 1']
    loop: start=0, step=1, limit=4
    $region2: #{isht.1} parent=1 // loop_pre_header
      _
    $region3: #{isht.1} parent=1 // loop_header
      %s8 = sphi 0, %s12
      %p9 = scmp.ge.s32.totalorder %s8, 4
      %s16 = sphi 0, %s16
      %s18 = sphi 0, %s16
      %s19 = sphi 0, %s18
      %s33 = sphi 0, %s19
      %s39 = sphi 0, %s41
      %s42 = sphi 0, %s39
      %s43 = sphi 0, %s42
      %s59 = sphi 0, %s43
      %s65 = sphi 0, %s67
      %s68 = sphi 0, %s65
      %s69 = sphi 0, %s68
      %s85 = sphi 0, %s69
    $region4: #{isht.1} parent=1 // loop_header_branch
      %11 = sbr.rel (%p9) target = $region8
    $region5: #{isht.1} parent=1 // loop_body
      %s13 = ssub.s32 %s8, 1
      %s14 = ssub.s32 %s8, 2
      %s15 = sadd.s32 %s8, 1
      %s17 = sadd.s32 %s16, 1
      %p20 = scmp.eq.s32.totalorder %s8, 1
      %p21 = scmp.ne.s32.totalorder %s16, %s18
      %p22 = scmp.eq.s32.totalorder %s8, 0
      %p23 = por %p21, %p22
      %p24 = scmp.ne.s32.totalorder %s16, %s18
      %p25 = scmp.eq.s32.totalorder %s13, 1
      %p26 = por %p24, %p25
      %p27 = scmp.ne.s32.totalorder %s18, %s19
      %p28 = scmp.eq.s32.totalorder %s13, 0
      %p29 = por %p27, %p28
      %p30 = scmp.ne.s32.totalorder %s18, %s19
      %p31 = scmp.eq.s32.totalorder %s14, 1
      %p32 = por %p30, %p31
      %p34 = scmp.ne.s32.totalorder %s19, %s33
      %p35 = scmp.eq.s32.totalorder %s14, 0
      %p36 = por %p34, %p35
      %s37 = ssub.s32 %s8, %s15
      %p38 = scmp.eq.s32.totalorder %s37, 0
      %s40 = sadd.s32 %s39, 1
      %s41 = scalar_select %p38, %s39, %s40
      %p44 = pneg %p38
      %p45 = scmp.eq.s32.totalorder %s8, 1
      %p46 = por %p44, %p45
      %p47 = scmp.ne.s32.totalorder %s39, %s42
      %p48 = scmp.eq.s32.totalorder %s8, 0
      %p49 = por %p47, %p48
      %p50 = scmp.ne.s32.totalorder %s39, %s42
      %p51 = scmp.eq.s32.totalorder %s13, 1
      %p52 = por %p50, %p51
      %p53 = scmp.ne.s32.totalorder %s42, %s43
      %p54 = scmp.eq.s32.totalorder %s13, 0
      %p55 = por %p53, %p54
      %p56 = scmp.ne.s32.totalorder %s42, %s43
      %p57 = scmp.eq.s32.totalorder %s14, 1
      %p58 = por %p56, %p57
      %p60 = scmp.ne.s32.totalorder %s43, %s59
      %p61 = scmp.eq.s32.totalorder %s14, 0
      %p62 = por %p60, %p61
      %s63 = ssub.s32 %s8, %s15
      %p64 = scmp.eq.s32.totalorder %s63, 0
      %s66 = sadd.s32 %s65, 1
      %s67 = scalar_select %p64, %s65, %s66
      %p70 = pneg %p64
      %p71 = scmp.eq.s32.totalorder %s8, 1
      %p72 = por %p70, %p71
      %p73 = scmp.ne.s32.totalorder %s65, %s68
      %p74 = scmp.eq.s32.totalorder %s8, 0
      %p75 = por %p73, %p74
      %p76 = scmp.ne.s32.totalorder %s65, %s68
      %p77 = scmp.eq.s32.totalorder %s13, 1
      %p78 = por %p76, %p77
      %p79 = scmp.ne.s32.totalorder %s68, %s69
      %p80 = scmp.eq.s32.totalorder %s13, 0
      %p81 = por %p79, %p80
      %p82 = scmp.ne.s32.totalorder %s68, %s69
      %p83 = scmp.eq.s32.totalorder %s14, 1
      %p84 = por %p82, %p83
      %p86 = scmp.ne.s32.totalorder %s69, %s85
      %p87 = scmp.eq.s32.totalorder %s14, 0
      %p88 = por %p86, %p87
      %p89 = scmp.le.s32.totalorder 1, %s8
      %p90 = scmp.lt.s32.totalorder %s8, 3
      %p91 = pnand %p89, %p90
      %p92 = pneg %p91
      // Predicated region
      $region9: #{isht.1} parent=5 // pred_check
        _
      $region10: #{isht.1} parent=5 // pred_check_branch
        %94 = sbr.rel (%p91) target = $region12
      $region11: #{isht.1} parent=5 // pred_region
        %s95 = ssub.s32 %s8, 1
        // Predicated region
        $region13: #{isht.1} parent=11 // pred_check
          %p96 = pneg %p29
        $region14: #{isht.1} parent=11 // pred_check_branch
          %98 = sbr.rel (%p96) target = $region16
        $region15: #{isht.1} parent=11 // pred_region
          _
        $region16: #{isht.1} parent=11 // pred_fallthru
          _
      $region12: #{isht.1} parent=5 // pred_fallthru
        _
      %p99 = scmp.lt.s32.totalorder %s8, 2
      // Predicated region
      $region17: #{isht.1} parent=5 // pred_check
        %p100 = pneg %p99
      $region18: #{isht.1} parent=5 // pred_check_branch
        %102 = sbr.rel (%p100) target = $region20
      $region19: #{isht.1} parent=5 // pred_region
        // Predicated region
        $region21: #{isht.1} parent=19 // pred_check
          %p103 = pneg %p49
        $region22: #{isht.1} parent=19 // pred_check_branch
          %105 = sbr.rel (%p103) target = $region24
        $region23: #{isht.1} parent=19 // pred_region
          %s106 = sand.u32 %s39, 1
          %s107 = sand.u32 %s39, 1
          %s108 = smul.addr %s107, 48
          %s109 = scalar_lea.vmem [#allocation2], %s108
          %s110 = smul.u32 3, %s8
          %s111 = smul.addr %s110, 8
          %s112 = scalar_lea.vmem %s1, %s111
          // Predicated region
          $region25: #{isht.1} parent=23 // pred_check
            _
          $region26: #{isht.1} parent=23 // pred_check_branch
            %114 = sbr.rel (0) target = $region28
          $region27: #{isht.1} parent=23 // pred_region
            // Predicated region
            $region29: #{isht.1} parent=27 // pred_check
              _
            $region30: #{isht.1} parent=27 // pred_check_branch
              %116 = sbr.rel (0) target = $region32
            $region31: #{isht.1} parent=27 // pred_region
              loop: start=0, step=1, limit=1
              $region33: #{isht.1} parent=31 // loop_pre_header
                _
              $region34: #{isht.1} parent=31 // loop_header
                %s118 = sphi 0, %s122
                %p119 = scmp.ge.s32.totalorder %s118, 1
                %s123 = sphi %s112, %s112
                %s124 = sphi %s109, %s109
              $region35: #{isht.1} parent=31 // loop_header_branch
                %121 = sbr.rel (%p119) target = $region39
              $region36: #{isht.1} parent=31 // loop_body
                %v125 = vld [vmem:[%s123] sm:$0xff]
                %126 = vst [vmem:[%s124] sm:$0xff] %v125
                %v127 = vld [vmem:[%s123 + $0x8] sm:$0xff]
                %128 = vst [vmem:[%s124 + $0x8] sm:$0xff] %v127
                %v129 = vld [vmem:[%s123 + $0x10] sm:$0xff]
                %130 = vst [vmem:[%s124 + $0x10] sm:$0xff] %v129
                %v131 = vld [vmem:[%s123 + $0x30] sm:$0xff]
                %132 = vst [vmem:[%s124 + $0x18] sm:$0xff] %v131
                %v133 = vld [vmem:[%s123 + $0x38] sm:$0xff]
                %134 = vst [vmem:[%s124 + $0x20] sm:$0xff] %v133
                %v135 = vld [vmem:[%s123 + $0x40] sm:$0xff]
                %136 = vst [vmem:[%s124 + $0x28] sm:$0xff] %v135
              $region37: #{isht.1} parent=31 // loop_footer
                %s122 = sadd.s32 1, %s118
              $region38: #{isht.1} parent=31 // loop_footer_branch
                %117 = sbr.rel target = $region34
              $region39: #{isht.1} parent=31 // loop_exit
                _
            $region32: #{isht.1} parent=27 // pred_fallthru
              _
            // Predicated region
            $region40: #{isht.1} parent=27 // pred_check
              _
            $region41: #{isht.1} parent=27 // pred_check_branch
              %138 = sbr.rel target = $region43
            $region42: #{isht.1} parent=27 // pred_region
              _
            $region43: #{isht.1} parent=27 // pred_fallthru
              _
          $region28: #{isht.1} parent=23 // pred_fallthru
            _
          %139 = vnop
        $region24: #{isht.1} parent=19 // pred_fallthru
          _
      $region20: #{isht.1} parent=5 // pred_fallthru
        _
      %p140 = scmp.le.s32.totalorder 1, %s8
      %p141 = scmp.lt.s32.totalorder %s8, 3
      %p142 = pnand %p140, %p141
      %p143 = pneg %p142
      // Predicated region
      $region44: #{isht.1} parent=5 // pred_check
        _
      $region45: #{isht.1} parent=5 // pred_check_branch
        %145 = sbr.rel (%p142) target = $region47
      $region46: #{isht.1} parent=5 // pred_region
        %s146 = ssub.s32 %s8, 1
        %s147 = sand.u32 %s42, 1
        %s148 = sand.u32 %s42, 1
        %s149 = smul.addr %s148, 48
        %s150 = scalar_lea.vmem [#allocation2], %s149
        // Predicated region
        $region48: #{isht.1} parent=46 // pred_check
          %p151 = pneg %p55
        $region49: #{isht.1} parent=46 // pred_check_branch
          %153 = sbr.rel (%p151) target = $region51
        $region50: #{isht.1} parent=46 // pred_region
          _
        $region51: #{isht.1} parent=46 // pred_fallthru
          _
        %p154 = pneg %p29
        %p155 = pneg %p26
        %s156 = sand.u32 %s42, 1
        %s157 = sand.u32 %s42, 1
        %s158 = smul.addr %s157, 48
        %s159 = scalar_lea.vmem [#allocation2], %s158
        %p160 = pneg %p55
        %p161 = pneg %p52
        %p162 = pneg %p81
        %p163 = pneg %p78
        %s164 = smul.u32 3, %s13
        %p165 = scmp.lt.s32.totalorder %s164, 5
        %s166 = scalar_select %p165, %s164, 5
        %s167 = smul.addr %s166, 8
        %s168 = scalar_lea.vmem %s2, %s167
        %s169 = smul.u32 3, %s13
        %s170 = smul.u32 3, %s13
        %p171 = scmp.lt.s32.totalorder %s170, 5
        %s172 = scalar_select %p171, %s170, 5
        %s173 = smul.addr %s172, 8
        %s174 = scalar_lea.vmem %s2, %s173
        %s175 = smul.u32 3, %s13
        %v176 = vld [vmem:[%s0] sm:$0xff]
        %v177 = vld [vmem:[%s150] sm:$0xff]
        %v178 = vld [vmem:[%s150 + $0x8] sm:$0xff]
        %v179 = vld [vmem:[%s150 + $0x10] sm:$0xff]
        %v180 = vld [vmem:[%s150 + $0x18] sm:$0xff]
        %v181 = vld [vmem:[%s150 + $0x20] sm:$0xff]
        %v182 = vld [vmem:[%s150 + $0x28] sm:$0xff]
        %vm183 = vcmask 130048
        %v185 = vsel %vm183, %v176, 0
        %187 = vmatprep.subr.mxu0 0.0
        %188 = vmatpush1.msra.mxu0 0.0
        %189 = vmatprep.subr.mxu0 0.0
        %190 = vmatpush1.msra.mxu0 0.0
        %191 = vmatprep.subr.mxu0 0.0
        %192 = vmatpush1.msra.mxu0 0.0
        %193 = vmatprep.subr.mxu0 0.0
        %194 = vmatpush1.msra.mxu0 0.0
        %195 = vmatprep.subr.mxu0 0.0
        %196 = vmatpush1.msra.mxu0 0.0
        %197 = vmatprep.subr.mxu0 0.0
        %198 = vmatpush1.msra.mxu0 0.0
        %199 = vmatprep.subr.mxu0 0.0
        %200 = vmatpush1.msra.mxu0 0.0
        %201 = vmatprep.subr.mxu0 0.0
        %202 = vmatpush1.msra.mxu0 0.0
        %203 = vmatprep.subr.mxu0 0.0
        %204 = vmatpush1.msra.mxu0 0.0
        %205 = vmatprep.subr.mxu0 0.0
        %206 = vmatpush1.msra.mxu0 0.0
        %207 = vmatprep.subr.mxu0 0.0
        %208 = vmatpush1.msra.mxu0 0.0
        %209 = vmatprep.subr.mxu0 0.0
        %210 = vmatpush1.msra.mxu0 0.0
        %211 = vmatprep.subr.mxu0 0.0
        %212 = vmatpush1.msra.mxu0 0.0
        %213 = vmatprep.subr.mxu0 0.0
        %214 = vmatpush1.msra.mxu0 0.0
        %215 = vmatprep.subr.mxu0 %v181
        %216 = vmatpush1.msra.mxu0 %v180
        %217 = vmatprep.subr.mxu0 %v178
        %218 = vmatpush1.msra.mxu0 %v177
        %219 = vmatprep.subr.mxu0 0.0
        %220 = vmatpush2.msra.mxu0 0.0
        %221 = vmatprep.subr.mxu0 0.0
        %222 = vmatpush2.msra.mxu0 0.0
        %223 = vmatprep.subr.mxu0 0.0
        %224 = vmatpush2.msra.mxu0 0.0
        %225 = vmatprep.subr.mxu0 0.0
        %226 = vmatpush2.msra.mxu0 0.0
        %227 = vmatprep.subr.mxu0 0.0
        %228 = vmatpush2.msra.mxu0 0.0
        %229 = vmatprep.subr.mxu0 0.0
        %230 = vmatpush2.msra.mxu0 0.0
        %231 = vmatprep.subr.mxu0 0.0
        %232 = vmatpush2.msra.mxu0 0.0
        %233 = vmatprep.subr.mxu0 0.0
        %234 = vmatpush2.msra.mxu0 0.0
        %235 = vmatprep.subr.mxu0 0.0
        %236 = vmatpush2.msra.mxu0 0.0
        %237 = vmatprep.subr.mxu0 0.0
        %238 = vmatpush2.msra.mxu0 0.0
        %239 = vmatprep.subr.mxu0 0.0
        %240 = vmatpush2.msra.mxu0 0.0
        %241 = vmatprep.subr.mxu0 0.0
        %242 = vmatpush2.msra.mxu0 0.0
        %243 = vmatprep.subr.mxu0 0.0
        %244 = vmatpush2.msra.mxu0 0.0
        %245 = vmatprep.subr.mxu0 0.0
        %246 = vmatpush2.msra.mxu0 0.0
        %247 = vmatprep.subr.mxu0 0.0
        %248 = vmatpush2.msra.mxu0 0.0
        %249 = vmatprep.subr.mxu0 0.0
        %250 = vmatpush2.msra.mxu0 0.0
        %251 = vmatprep.mubr.f32.mxu0 0.0
        %252 = vmatmul.mubr.f32.gmra.mxu0 %v185
        %v253 = vpop.f32.mrf.mxu0
        %v254 = vadd.f32 0.0, %v253
        %v255 = vpop.f32.mrf.mxu0
        %v256 = vadd.f32 0.0, %v255
        %257 = vdwg.mxu0
        %258 = vmatprep.subr.mxu0 0.0
        %259 = vmatpush1.msra.mxu0 0.0
        %260 = vmatprep.subr.mxu0 0.0
        %261 = vmatpush1.msra.mxu0 0.0
        %262 = vmatprep.subr.mxu0 0.0
        %263 = vmatpush1.msra.mxu0 0.0
        %264 = vmatprep.subr.mxu0 0.0
        %265 = vmatpush1.msra.mxu0 0.0
        %266 = vmatprep.subr.mxu0 0.0
        %267 = vmatpush1.msra.mxu0 0.0
        %268 = vmatprep.subr.mxu0 0.0
        %269 = vmatpush1.msra.mxu0 0.0
        %270 = vmatprep.subr.mxu0 0.0
        %271 = vmatpush1.msra.mxu0 0.0
        %272 = vmatprep.subr.mxu0 0.0
        %273 = vmatpush1.msra.mxu0 0.0
        %274 = vmatprep.subr.mxu0 0.0
        %275 = vmatpush1.msra.mxu0 0.0
        %276 = vmatprep.subr.mxu0 0.0
        %277 = vmatpush1.msra.mxu0 0.0
        %278 = vmatprep.subr.mxu0 0.0
        %279 = vmatpush1.msra.mxu0 0.0
        %280 = vmatprep.subr.mxu0 0.0
        %281 = vmatpush1.msra.mxu0 0.0
        %282 = vmatprep.subr.mxu0 0.0
        %283 = vmatpush1.msra.mxu0 0.0
        %284 = vmatprep.subr.mxu0 0.0
        %285 = vmatpush1.msra.mxu0 0.0
        %286 = vmatprep.subr.mxu0 0.0
        %287 = vmatpush1.msra.mxu0 %v182
        %288 = vmatprep.subr.mxu0 0.0
        %289 = vmatpush1.msra.mxu0 %v179
        %290 = vmatprep.subr.mxu0 0.0
        %291 = vmatpush2.msra.mxu0 0.0
        %292 = vmatprep.subr.mxu0 0.0
        %293 = vmatpush2.msra.mxu0 0.0
        %294 = vmatprep.subr.mxu0 0.0
        %295 = vmatpush2.msra.mxu0 0.0
        %296 = vmatprep.subr.mxu0 0.0
        %297 = vmatpush2.msra.mxu0 0.0
        %298 = vmatprep.subr.mxu0 0.0
        %299 = vmatpush2.msra.mxu0 0.0
        %300 = vmatprep.subr.mxu0 0.0
        %301 = vmatpush2.msra.mxu0 0.0
        %302 = vmatprep.subr.mxu0 0.0
        %303 = vmatpush2.msra.mxu0 0.0
        %304 = vmatprep.subr.mxu0 0.0
        %305 = vmatpush2.msra.mxu0 0.0
        %306 = vmatprep.subr.mxu0 0.0
        %307 = vmatpush2.msra.mxu0 0.0
        %308 = vmatprep.subr.mxu0 0.0
        %309 = vmatpush2.msra.mxu0 0.0
        %310 = vmatprep.subr.mxu0 0.0
        %311 = vmatpush2.msra.mxu0 0.0
        %312 = vmatprep.subr.mxu0 0.0
        %313 = vmatpush2.msra.mxu0 0.0
        %314 = vmatprep.subr.mxu0 0.0
        %315 = vmatpush2.msra.mxu0 0.0
        %316 = vmatprep.subr.mxu0 0.0
        %317 = vmatpush2.msra.mxu0 0.0
        %318 = vmatprep.subr.mxu0 0.0
        %319 = vmatpush2.msra.mxu0 0.0
        %320 = vmatprep.subr.mxu0 0.0
        %321 = vmatpush2.msra.mxu0 0.0
        %322 = vmatprep.mubr.f32.mxu0 0.0
        %323 = vmatmul.mubr.f32.gmra.mxu0 %v185
        %v324 = vpop.f32.mrf.mxu0
        %v325 = vadd.f32 0.0, %v324
        %v326 = vpop.f32.mrf.mxu0
        %327 = vdwg.mxu0
        %328 = vst [vmem:[%s174] sm:$0xff] %v254
        %329 = vst [vmem:[%s174 + $0x8] sm:$0xff] %v256
        %330 = vst [vmem:[%s174 + $0x10] sm:$0xff] %v325
        %s331 = smul.u32 3, %s13
        %p332 = scmp.lt.s32.totalorder %s331, 5
        %s333 = scalar_select %p332, %s331, 5
        %s334 = smul.addr %s333, 8
        %s335 = scalar_lea.vmem %s2, %s334
        // Predicated region
        $region52: #{isht.1} parent=46 // pred_check
          %p336 = pneg %p78
        $region53: #{isht.1} parent=46 // pred_check_branch
          %338 = sbr.rel (%p336) target = $region55
        $region54: #{isht.1} parent=46 // pred_region
          %s339 = smul.u32 3, %s13
        $region55: #{isht.1} parent=46 // pred_fallthru
          _
      $region47: #{isht.1} parent=5 // pred_fallthru
        _
      %p340 = scmp.le.s32.totalorder 2, %s8
      // Predicated region
      $region56: #{isht.1} parent=5 // pred_check
        %p341 = pneg %p340
      $region57: #{isht.1} parent=5 // pred_check_branch
        %343 = sbr.rel (%p341) target = $region59
      $region58: #{isht.1} parent=5 // pred_region
        %s344 = ssub.s32 %s8, 2
        // Predicated region
        $region60: #{isht.1} parent=58 // pred_check
          %p345 = pneg %p84
        $region61: #{isht.1} parent=58 // pred_check_branch
          %347 = sbr.rel (%p345) target = $region63
        $region62: #{isht.1} parent=58 // pred_region
          %s348 = smul.u32 3, %s14
          %p349 = scmp.lt.s32.totalorder %s348, 5
          %s350 = scalar_select %p349, %s348, 5
          %s351 = smul.addr %s350, 8
          %s352 = scalar_lea.vmem %s2, %s351
        $region63: #{isht.1} parent=58 // pred_fallthru
          _
      $region59: #{isht.1} parent=5 // pred_fallthru
        _
    $region6: #{isht.1} parent=1 // loop_footer
      %s12 = sadd.s32 1, %s8
    $region7: #{isht.1} parent=1 // loop_footer_branch
      %7 = sbr.rel target = $region3
    $region8: #{isht.1} parent=1 // loop_exit
      _

</llo_original>
